<compile_context>
chip_gen: v6e
topology: v6e:2x2x1
jax: 0.10.0
libtpu: 0.0.40
codegen_flags: <defaults>
</compile_context>

<pallas_src>
import math

import jax
import jax.numpy as jnp
from jax.experimental import pallas as pl
from jax.experimental.pallas import tpu as pltpu


# ------------------------- Pallas kernel -------------------------

def _gcn_fused_kernel(adj_ref, x_ref, w1_ref, w2_ref, wlt_ref, b_ref, out_ref):
    """Fused conv1+relu, conv2+relu, (identity dropout), linear.

    Matmul operands are bf16 (MXU-native), accumulation is f32
    (preferred_element_type), relu/bias/output are f32. All operands are padded
    with zeros to lane multiples of 128, so the padded math equals the unpadded
    math exactly (up to bf16 rounding of the operands).
    """
    adj = adj_ref[...]                                     # bf16 (Np, Np)

    # --- Layer 1: relu( (adj @ x) @ W1 )  [reassociated adj @ (x @ W1)] ---
    t = jnp.dot(adj, x_ref[...], preferred_element_type=jnp.float32)
    h = jnp.maximum(
        jnp.dot(t.astype(jnp.bfloat16), w1_ref[...],
                preferred_element_type=jnp.float32), 0.0)

    # --- Layer 2: relu( (adj @ h1) @ W2 ) --- (h1 stays VMEM/vreg resident)
    t = jnp.dot(adj, h.astype(jnp.bfloat16), preferred_element_type=jnp.float32)
    h = jnp.maximum(
        jnp.dot(t.astype(jnp.bfloat16), w2_ref[...],
                preferred_element_type=jnp.float32), 0.0)

    # Dropout(0.5) is identity here (inference / eval-mode semantics).
    # --- Linear epilogue: y = h2 @ W_lin^T + b  (lane-dense padded f32 output) ---
    out_ref[...] = (
        jnp.dot(h.astype(jnp.bfloat16), wlt_ref[...],
                preferred_element_type=jnp.float32)
        + b_ref[...]
    )


# ------------------------- wrappers -------------------------

def _round_up(v, m):
    return ((v + m - 1) // m) * m


def _full_spec(shape):
    # Whole array as a single block (small graphs -> everything fits VMEM).
    return pl.BlockSpec(shape, lambda: tuple(0 for _ in shape))


def prepare_params(params, num_features, hidden, num_classes):
    """One-time padding / transposition / bf16 cast of parameters."""
    Fp = _round_up(num_features, 128)
    Hp = _round_up(hidden, 128)
    Cp = _round_up(num_classes, 128)

    w1p = (jnp.zeros((Fp, Hp), jnp.float32)
           .at[:num_features, :hidden].set(params["w1"]).astype(jnp.bfloat16))
    w2p = (jnp.zeros((Hp, Hp), jnp.float32)
           .at[:hidden, :hidden].set(params["w2"]).astype(jnp.bfloat16))
    # Pre-transpose the Linear weight ([C, H] PyTorch layout -> [H, C]) and pad.
    wltp = (jnp.zeros((Hp, Cp), jnp.float32)
            .at[:hidden, :num_classes].set(params["w_lin"].T).astype(jnp.bfloat16))
    # Bias stays f32 (added to the f32 accumulator).
    bp = jnp.zeros((1, Cp), jnp.float32).at[0, :num_classes].set(params["b_lin"])

    return {
        "w1p": w1p, "w2p": w2p, "wltp": wltp, "bp": bp,
        "F": num_features, "H": hidden, "C": num_classes,
    }


def prepare_graph(x, adj):
    """One-time padding / bf16 cast of the (per-graph static) adjacency and features."""
    N, F = x.shape
    assert adj.shape == (N, N)
    Np = _round_up(N, 128)   # lane-dense adj, full MXU contraction depth
    Fp = _round_up(F, 128)
    xp = (jnp.zeros((Np, Fp), jnp.float32)
          .at[:N, :F].set(x).astype(jnp.bfloat16))
    adjp = (jnp.zeros((Np, Np), jnp.float32)
            .at[:N, :N].set(adj).astype(jnp.bfloat16))
    return {"adjp": adjp, "xp": xp, "N": N, "F": F}


def gcn_pynq_forward(pp, gp):
    """Full GCN_PYNQ forward (acc=0 path), single fused Pallas launch."""
    adjp, xp = gp["adjp"], gp["xp"]
    N = gp["N"]
    assert gp["F"] == pp["F"]

    Np = adjp.shape[0]
    Fp = pp["w1p"].shape[0]
    Hp = pp["w2p"].shape[0]
    Cp = pp["wltp"].shape[1]
    C = pp["C"]
    assert xp.shape == (Np, Fp)

    # Honest VMEM budget: Pallas double-buffers each BlockSpec-managed buffer,
    # so inputs and the output count 2x; add the two live f32 intermediates.
    bf16_in = 2 * (Np * Np + Np * Fp + Fp * Hp + Hp * Hp + Hp * Cp)
    f32_in = 4 * (8 * Cp)                      # bias, padded to an (8,128) tile
    f32_out = 4 * (Np * Cp)
    live = 4 * (2 * Np * max(Fp, Hp) + Np * Hp)
    vmem_bytes = 2 * (bf16_in + f32_in + f32_out) + live
    # TODO(synk): beyond this budget switch to the tiled two-launch path described above.
    assert vmem_bytes < 40 * 1024 * 1024, "graph too large for the fused single-block kernel"

    flops = 2 * (Np * Np * Fp + Np * Fp * Hp + Np * Np * Hp + Np * Hp * Hp + Np * Hp * Cp)
    cost = pl.CostEstimate(
        flops=flops,
        transcendentals=0,
        bytes_accessed=bf16_in + f32_in + f32_out,
    )

    y_p = pl.pallas_call(
        _gcn_fused_kernel,
        out_shape=jax.ShapeDtypeStruct((Np, Cp), jnp.float32),
        in_specs=[
            _full_spec(adjp.shape),
            _full_spec(xp.shape),
            _full_spec(pp["w1p"].shape),
            _full_spec(pp["w2p"].shape),
            _full_spec(pp["wltp"].shape),
            _full_spec(pp["bp"].shape),
        ],
        out_specs=_full_spec((Np, Cp)),
        cost_estimate=cost,
        compiler_params=pltpu.CompilerParams(vmem_limit_bytes=40 * 1024 * 1024),
    )(adjp, xp, pp["w1p"], pp["w2p"], pp["wltp"], pp["bp"])

    # Slice the lane-dense padded slab back to the logical [N, C] output.
    # (Padded rows [N:Np] hold the broadcast bias -- never reuse the padded slab.)
    return y_p[:N, :C]


# ------------------------- parameter init -------------------------

def init_params(key, num_features, hidden_channels, num_classes):
    k1, k2, k3, k4 = jax.random.split(key, 4)

    def glorot(k, fan_in, fan_out):
        stdv = math.sqrt(6.0 / (fan_in + fan_out))   # GraphConvolution_pynq.reset_parameters
        return jax.random.uniform(
            k, (fan_in, fan_out), jnp.float32, minval=-stdv, maxval=stdv
        )

    w1 = glorot(k1, num_features, hidden_channels)
    w2 = glorot(k2, hidden_channels, hidden_channels)

    # torch.nn.Linear default init: U(-1/sqrt(fan_in), 1/sqrt(fan_in))
    bound = 1.0 / math.sqrt(hidden_channels)
    w_lin = jax.random.uniform(
        k3, (num_classes, hidden_channels), jnp.float32, minval=-bound, maxval=bound
    )
    b_lin = jax.random.uniform(
        k4, (num_classes,), jnp.float32, minval=-bound, maxval=bound
    )
    return {"w1": w1, "w2": w2, "w_lin": w_lin, "b_lin": b_lin}


# ------------------------- main -------------------------

if __name__ == "__main__":
    N = 32              # number of graph nodes
    F = 16              # num_features
    H = 64              # hidden_channels (matches the spec's hidden_channels=64)
    C = 8               # num_classes

    key = jax.random.PRNGKey(0)
    k_x, k_adj, k_p = jax.random.split(key, 3)

    # Node features.
    x = jax.random.normal(k_x, (N, F), jnp.float32)

    # Sparse-ish symmetric adjacency with self loops, row-normalized (dense layout).
    a = (jax.random.uniform(k_adj, (N, N)) < 0.15).astype(jnp.float32)
    a = jnp.maximum(a, a.T) + jnp.eye(N, dtype=jnp.float32)
    adj = a / jnp.sum(a, axis=1, keepdims=True)

    params = init_params(k_p, F, H, C)

    # One-time (per-model / per-graph) layout prep: padding + bf16 casts.
    padded_params = prepare_params(params, F, H, C)
    graph = prepare_graph(x, adj)
    graph = jax.tree_util.tree_map(
        lambda t: jax.block_until_ready(t) if isinstance(t, jax.Array) else t, graph)

    out = gcn_pynq_forward(padded_params, graph)
    out = jax.block_until_ready(out)

    # Reference check against plain f32 JAX (same math as the acc==0 torch path).
    # Tolerance loosened for bf16 matmul operands (f32 accumulation).
    ref = jnp.maximum(adj @ (x @ params["w1"]), 0.0)
    ref = jnp.maximum(adj @ (ref @ params["w2"]), 0.0)
    ref = ref @ params["w_lin"].T + params["b_lin"]
    assert out.shape == (N, C)
    assert jnp.allclose(out, ref, atol=3e-2, rtol=3e-2), (
        float(jnp.max(jnp.abs(out - ref))))

    print("KERNEL_OK")
</pallas_src>

<mosaic_0001>
module attributes {stable_mosaic.version = 11 : i64} {
  func.func @_gcn_fused_kernel(%arg0: memref<128x128xbf16, #tpu.memory_space<vmem>>, %arg1: memref<128x128xbf16, #tpu.memory_space<vmem>>, %arg2: memref<128x128xbf16, #tpu.memory_space<vmem>>, %arg3: memref<128x128xbf16, #tpu.memory_space<vmem>>, %arg4: memref<128x128xbf16, #tpu.memory_space<vmem>>, %arg5: memref<1x128xf32, #tpu.memory_space<vmem>>, %arg6: memref<128x128xf32, #tpu.memory_space<vmem>>) attributes {dimension_semantics = [], scalar_prefetch = 0 : i64, scratch_operands = 0 : i64, tpu.core_type = #tpu.core_type<tc>} {
    %c0 = arith.constant 0 : index
    %c0_0 = arith.constant 0 : index
    %0 = vector.load %arg0[%c0, %c0_0] : memref<128x128xbf16, #tpu.memory_space<vmem>>, vector<128x128xbf16>
    %c0_1 = arith.constant 0 : index
    %c0_2 = arith.constant 0 : index
    %1 = vector.load %arg1[%c0_1, %c0_2] : memref<128x128xbf16, #tpu.memory_space<vmem>>, vector<128x128xbf16>
    %cst = arith.constant dense<0.000000e+00> : vector<128x128xf32>
    %2 = tpu.matmul %0, %1, %cst {dimension_numbers = #tpu.dot_dimension_numbers<[1], [0], [0], [1], [0, 0, 1, 1], [], []>} : vector<128x128xbf16>, vector<128x128xbf16>, vector<128x128xf32> -> vector<128x128xf32>
    %3 = arith.truncf %2 : vector<128x128xf32> to vector<128x128xbf16>
    %c0_3 = arith.constant 0 : index
    %c0_4 = arith.constant 0 : index
    %4 = vector.load %arg2[%c0_3, %c0_4] : memref<128x128xbf16, #tpu.memory_space<vmem>>, vector<128x128xbf16>
    %cst_5 = arith.constant dense<0.000000e+00> : vector<128x128xf32>
    %5 = tpu.matmul %3, %4, %cst_5 {dimension_numbers = #tpu.dot_dimension_numbers<[1], [0], [0], [1], [0, 0, 1, 1], [], []>} : vector<128x128xbf16>, vector<128x128xbf16>, vector<128x128xf32> -> vector<128x128xf32>
    %cst_6 = arith.constant 0.000000e+00 : f32
    %6 = vector.broadcast %cst_6 : f32 to vector<128x128xf32>
    %7 = arith.maximumf %5, %6 : vector<128x128xf32>
    %8 = arith.truncf %7 : vector<128x128xf32> to vector<128x128xbf16>
    %cst_7 = arith.constant dense<0.000000e+00> : vector<128x128xf32>
    %9 = tpu.matmul %0, %8, %cst_7 {dimension_numbers = #tpu.dot_dimension_numbers<[1], [0], [0], [1], [0, 0, 1, 1], [], []>} : vector<128x128xbf16>, vector<128x128xbf16>, vector<128x128xf32> -> vector<128x128xf32>
    %10 = arith.truncf %9 : vector<128x128xf32> to vector<128x128xbf16>
    %c0_8 = arith.constant 0 : index
    %c0_9 = arith.constant 0 : index
    %11 = vector.load %arg3[%c0_8, %c0_9] : memref<128x128xbf16, #tpu.memory_space<vmem>>, vector<128x128xbf16>
    %cst_10 = arith.constant dense<0.000000e+00> : vector<128x128xf32>
    %12 = tpu.matmul %10, %11, %cst_10 {dimension_numbers = #tpu.dot_dimension_numbers<[1], [0], [0], [1], [0, 0, 1, 1], [], []>} : vector<128x128xbf16>, vector<128x128xbf16>, vector<128x128xf32> -> vector<128x128xf32>
    %cst_11 = arith.constant 0.000000e+00 : f32
    %13 = vector.broadcast %cst_11 : f32 to vector<128x128xf32>
    %14 = arith.maximumf %12, %13 : vector<128x128xf32>
    %15 = arith.truncf %14 : vector<128x128xf32> to vector<128x128xbf16>
    %c0_12 = arith.constant 0 : index
    %c0_13 = arith.constant 0 : index
    %16 = vector.load %arg4[%c0_12, %c0_13] : memref<128x128xbf16, #tpu.memory_space<vmem>>, vector<128x128xbf16>
    %cst_14 = arith.constant dense<0.000000e+00> : vector<128x128xf32>
    %17 = tpu.matmul %15, %16, %cst_14 {dimension_numbers = #tpu.dot_dimension_numbers<[1], [0], [0], [1], [0, 0, 1, 1], [], []>} : vector<128x128xbf16>, vector<128x128xbf16>, vector<128x128xf32> -> vector<128x128xf32>
    %c0_15 = arith.constant 0 : index
    %c0_16 = arith.constant 0 : index
    %18 = vector.load %arg5[%c0_15, %c0_16] : memref<1x128xf32, #tpu.memory_space<vmem>>, vector<1x128xf32>
    %19 = vector.broadcast %18 : vector<1x128xf32> to vector<128x128xf32>
    %20 = arith.addf %17, %19 : vector<128x128xf32>
    %c0_17 = arith.constant 0 : index
    %c0_18 = arith.constant 0 : index
    %21 = vector.load %arg6[%c0_17, %c0_18] : memref<128x128xf32, #tpu.memory_space<vmem>>, vector<128x128xf32>
    tpu.vector_store %arg6[%c0_17, %c0_18], %20 {strides = array<i32>} : memref<128x128xf32, #tpu.memory_space<vmem>>, vector<128x128xf32>,
    return
  }
}

</mosaic_0001>

<llo_original>
// kernel: tpu_custom_call.1
$region0: #{tpu_custom_call.1}
  #allocation0 [shape = 'u32[]', space=smem, size = 0x4, offset = 0x4, fixed_abs, tag = 'smem constant byte address 0x4 - core index']
  #allocation1 [shape = 'u32[144,128]{1,0:T(1,128)}', space=vmem, size = 0x12000, scoped, tag = 'internal scratch']
  %s0 = inlined_call_operand.hbm [shape: bf16[128,128], index: 0, kind: input, shape index: {}]
  %s1 = inlined_call_operand.hbm [shape: bf16[128,128], index: 1, kind: input, shape index: {}]
  %s2 = inlined_call_operand.hbm [shape: bf16[128,128], index: 2, kind: input, shape index: {}]
  %s3 = inlined_call_operand.hbm [shape: bf16[128,128], index: 3, kind: input, shape index: {}]
  %s4 = inlined_call_operand.hbm [shape: bf16[128,128], index: 4, kind: input, shape index: {}]
  %s5 = inlined_call_operand.vmem [shape: f32[1,128], index: 5, kind: input, shape index: {}]
  %s6 = inlined_call_operand.hbm [shape: f32[128,128], index: 6, kind: output, shape index: {}]
  %s7 = sld [smem:[#allocation0]]
  $region54: #{tpu_custom_call.1} parent=0
    _
  %s9 = ssub.s32 1, %s7
  %s10 = scalar_select 0, %s9, %s7
  $region1: #{tpu_custom_call.1} parent=0
    #allocation2 [shape = 'u8[32768]{0}', space=vmem, size = 0x8000, scoped, tag = 'input window, operand 0, single buffered']
    #allocation3 [shape = 's32[1]{0}', space=sflag, size = 0x4, scoped, tag = 'scoped memory for tpu_custom_call.1']
    #allocation4 [shape = 's32[1]{0}', space=sflag, size = 0x4, scoped, tag = 'scoped memory for tpu_custom_call.1']
    #allocation5 [shape = 'u8[32768]{0}', space=vmem, size = 0x8000, scoped, tag = 'input window, operand 1, single buffered']
    #allocation6 [shape = 's32[1]{0}', space=sflag, size = 0x4, scoped, tag = 'scoped memory for tpu_custom_call.1']
    #allocation7 [shape = 'u8[32768]{0}', space=vmem, size = 0x8000, scoped, tag = 'input window, operand 2, single buffered']
    #allocation8 [shape = 'u8[32768]{0}', space=vmem, size = 0x8000, scoped, tag = 'input window, operand 3, single buffered']
    #allocation9 [shape = 's32[1]{0}', space=sflag, size = 0x4, scoped, tag = 'scoped memory for tpu_custom_call.1']
    #allocation10 [shape = 'u8[32768]{0}', space=vmem, size = 0x8000, scoped, tag = 'input window, operand 4, single buffered']
    #allocation11 [shape = 'u8[65536]{0}', space=vmem, size = 0x10000, scoped, tag = 'output window, operand 0, single buffered']
    %11 = vsyncpa [#allocation3], 0
    %12 = vsyncpa [#allocation6], 0
    %13 = vsyncpa [#allocation9], 0
    %14 = vsyncpa [#allocation4], 0
    // Predicated region
    $region2: #{tpu_custom_call.1} parent=1 // pred_check
      _
    $region3: #{tpu_custom_call.1} parent=1 // pred_check_branch
      %16 = sbr.rel (0) target = $region5
    $region4: #{tpu_custom_call.1} parent=1 // pred_region
      %s18 = ssub.s32 1024, 1024
      %19 = vsyncadd [#allocation3], %s18
      %s20 = sshll.u32 [#allocation2], 4
      %s21 = int_to_ptr.vmem [resolvable:$true] %s20
      %26 = dma.hbm_to_vmem [thread:$0]  %s0, 1024, %s21, [#allocation3], 64, 64, 4
    $region5: #{tpu_custom_call.1} parent=1 // pred_fallthru
      _
    // Predicated region
    $region6: #{tpu_custom_call.1} parent=1 // pred_check
      _
    $region7: #{tpu_custom_call.1} parent=1 // pred_check_branch
      %28 = sbr.rel (0) target = $region9
    $region8: #{tpu_custom_call.1} parent=1 // pred_region
      %s30 = ssub.s32 1024, 1024
      %31 = vsyncadd [#allocation6], %s30
      %s32 = sshll.u32 [#allocation5], 4
      %s33 = int_to_ptr.vmem [resolvable:$true] %s32
      %38 = dma.hbm_to_vmem [thread:$0]  %s1, 1024, %s33, [#allocation6], 64, 64, 4
    $region9: #{tpu_custom_call.1} parent=1 // pred_fallthru
      _
    // Predicated region
    $region10: #{tpu_custom_call.1} parent=1 // pred_check
      _
    $region11: #{tpu_custom_call.1} parent=1 // pred_check_branch
      %40 = sbr.rel (0) target = $region13
    $region12: #{tpu_custom_call.1} parent=1 // pred_region
      %s42 = ssub.s32 1024, 1024
      %43 = vsyncadd [#allocation6], %s42
      %s44 = sshll.u32 [#allocation7], 4
      %s45 = int_to_ptr.vmem [resolvable:$true] %s44
      %50 = dma.hbm_to_vmem [thread:$0]  %s2, 1024, %s45, [#allocation6], 64, 64, 4
    $region13: #{tpu_custom_call.1} parent=1 // pred_fallthru
      _
    // Predicated region
    $region14: #{tpu_custom_call.1} parent=1 // pred_check
      _
    $region15: #{tpu_custom_call.1} parent=1 // pred_check_branch
      %52 = sbr.rel (0) target = $region17
    $region16: #{tpu_custom_call.1} parent=1 // pred_region
      %s54 = ssub.s32 1024, 1024
      %55 = vsyncadd [#allocation9], %s54
      %s56 = sshll.u32 [#allocation8], 4
      %s57 = int_to_ptr.vmem [resolvable:$true] %s56
      %62 = dma.hbm_to_vmem [thread:$0]  %s3, 1024, %s57, [#allocation9], 64, 64, 4
    $region17: #{tpu_custom_call.1} parent=1 // pred_fallthru
      _
    // Predicated region
    $region18: #{tpu_custom_call.1} parent=1 // pred_check
      _
    $region19: #{tpu_custom_call.1} parent=1 // pred_check_branch
      %64 = sbr.rel (0) target = $region21
    $region20: #{tpu_custom_call.1} parent=1 // pred_region
      %s66 = ssub.s32 1024, 1024
      %67 = vsyncadd [#allocation9], %s66
      %s68 = sshll.u32 [#allocation10], 4
      %s69 = int_to_ptr.vmem [resolvable:$true] %s68
      %74 = dma.hbm_to_vmem [thread:$0]  %s4, 1024, %s69, [#allocation9], 64, 64, 4
    $region21: #{tpu_custom_call.1} parent=1 // pred_fallthru
      _
    // Predicated region
    $region22: #{tpu_custom_call.1} parent=1 // pred_check
      _
    $region23: #{tpu_custom_call.1} parent=1 // pred_check_branch
      %76 = sbr.rel (0) target = $region25
    $region24: #{tpu_custom_call.1} parent=1 // pred_region
      _
    $region25: #{tpu_custom_call.1} parent=1 // pred_fallthru
      _
    // Predicated region
    $region26: #{tpu_custom_call.1} parent=1 // pred_check
      _
    $region27: #{tpu_custom_call.1} parent=1 // pred_check_branch
      %78 = sbr.rel (0) target = $region29
    $region28: #{tpu_custom_call.1} parent=1 // pred_region
      %79 = dma.done [#allocation3], 1024
    $region29: #{tpu_custom_call.1} parent=1 // pred_fallthru
      _
    // Predicated region
    $region30: #{tpu_custom_call.1} parent=1 // pred_check
      _
    $region31: #{tpu_custom_call.1} parent=1 // pred_check_branch
      %81 = sbr.rel (0) target = $region33
    $region32: #{tpu_custom_call.1} parent=1 // pred_region
      %82 = dma.done [#allocation6], 1024
    $region33: #{tpu_custom_call.1} parent=1 // pred_fallthru
      _
    // Predicated region
    $region34: #{tpu_custom_call.1} parent=1 // pred_check
      _
    $region35: #{tpu_custom_call.1} parent=1 // pred_check_branch
      %84 = sbr.rel (0) target = $region37
    $region36: #{tpu_custom_call.1} parent=1 // pred_region
      %85 = dma.done [#allocation6], 1024
    $region37: #{tpu_custom_call.1} parent=1 // pred_fallthru
      _
    // Predicated region
    $region38: #{tpu_custom_call.1} parent=1 // pred_check
      _
    $region39: #{tpu_custom_call.1} parent=1 // pred_check_branch
      %87 = sbr.rel (0) target = $region41
    $region40: #{tpu_custom_call.1} parent=1 // pred_region
      %88 = dma.done [#allocation9], 1024
    $region41: #{tpu_custom_call.1} parent=1 // pred_fallthru
      _
    // Predicated region
    $region42: #{tpu_custom_call.1} parent=1 // pred_check
      _
    $region43: #{tpu_custom_call.1} parent=1 // pred_check_branch
      %90 = sbr.rel (0) target = $region45
    $region44: #{tpu_custom_call.1} parent=1 // pred_region
      %91 = dma.done [#allocation9], 1024
    $region45: #{tpu_custom_call.1} parent=1 // pred_fallthru
      _
    %v93 = vld [vmem:[#allocation2] sm:$0xf]
    %v94 = vld [vmem:[#allocation2 + $0x4] sm:$0xf]
    %v95 = vld [vmem:[#allocation2 + $0x8] sm:$0xf]
    %v96 = vld [vmem:[#allocation2 + $0xc] sm:$0xf]
    %v97 = vld [vmem:[#allocation2 + $0x10] sm:$0xf]
    %v98 = vld [vmem:[#allocation2 + $0x14] sm:$0xf]
    %v99 = vld [vmem:[#allocation2 + $0x18] sm:$0xf]
    %v100 = vld [vmem:[#allocation2 + $0x1c] sm:$0xf]
    %v101 = vld [vmem:[#allocation2 + $0x20] sm:$0xf]
    %v102 = vld [vmem:[#allocation2 + $0x24] sm:$0xf]
    %v103 = vld [vmem:[#allocation2 + $0x28] sm:$0xf]
    %v104 = vld [vmem:[#allocation2 + $0x2c] sm:$0xf]
    %v105 = vld [vmem:[#allocation2 + $0x30] sm:$0xf]
    %v106 = vld [vmem:[#allocation2 + $0x34] sm:$0xf]
    %v107 = vld [vmem:[#allocation2 + $0x38] sm:$0xf]
    %v108 = vld [vmem:[#allocation2 + $0x3c] sm:$0xf]
    %v109 = vld [vmem:[#allocation5] sm:$0xf]
    %v110 = vld [vmem:[#allocation5 + $0x4] sm:$0xf]
    %v111 = vld [vmem:[#allocation5 + $0x8] sm:$0xf]
    %v112 = vld [vmem:[#allocation5 + $0xc] sm:$0xf]
    %v113 = vld [vmem:[#allocation5 + $0x10] sm:$0xf]
    %v114 = vld [vmem:[#allocation5 + $0x14] sm:$0xf]
    %v115 = vld [vmem:[#allocation5 + $0x18] sm:$0xf]
    %v116 = vld [vmem:[#allocation5 + $0x1c] sm:$0xf]
    %v117 = vld [vmem:[#allocation5 + $0x20] sm:$0xf]
    %v118 = vld [vmem:[#allocation5 + $0x24] sm:$0xf]
    %v119 = vld [vmem:[#allocation5 + $0x28] sm:$0xf]
    %v120 = vld [vmem:[#allocation5 + $0x2c] sm:$0xf]
    %v121 = vld [vmem:[#allocation5 + $0x30] sm:$0xf]
    %v122 = vld [vmem:[#allocation5 + $0x34] sm:$0xf]
    %v123 = vld [vmem:[#allocation5 + $0x38] sm:$0xf]
    %v124 = vld [vmem:[#allocation5 + $0x3c] sm:$0xf]
    %v141 = vunpack.c.l.b16 %v93
    %v142 = vunpack.c.l.b16 %v94
    %v143 = vunpack.c.l.b16 %v95
    %v144 = vunpack.c.l.b16 %v96
    %v145 = vunpack.c.l.b16 %v97
    %v146 = vunpack.c.l.b16 %v98
    %v147 = vunpack.c.l.b16 %v99
    %v148 = vunpack.c.l.b16 %v100
    %v149 = vunpack.c.l.b16 %v101
    %v150 = vunpack.c.l.b16 %v102
    %v151 = vunpack.c.l.b16 %v103
    %v152 = vunpack.c.l.b16 %v104
    %v153 = vunpack.c.l.b16 %v105
    %v154 = vunpack.c.l.b16 %v106
    %v155 = vunpack.c.l.b16 %v107
    %v156 = vunpack.c.l.b16 %v108
    %v157 = vpack.c.b16 %v142, %v141
    %v158 = vpack.c.b16 %v144, %v143
    %v159 = vpack.c.b16 %v146, %v145
    %v160 = vpack.c.b16 %v148, %v147
    %v161 = vpack.c.b16 %v150, %v149
    %v162 = vpack.c.b16 %v152, %v151
    %v163 = vpack.c.b16 %v154, %v153
    %v164 = vpack.c.b16 %v156, %v155
    %v189 = vunpack.c.l.b16 %v109
    %v190 = vunpack.c.l.b16 %v110
    %v191 = vunpack.c.l.b16 %v111
    %v192 = vunpack.c.l.b16 %v112
    %v193 = vunpack.c.l.b16 %v113
    %v194 = vunpack.c.l.b16 %v114
    %v195 = vunpack.c.l.b16 %v115
    %v196 = vunpack.c.l.b16 %v116
    %v197 = vunpack.c.l.b16 %v117
    %v198 = vunpack.c.l.b16 %v118
    %v199 = vunpack.c.l.b16 %v119
    %v200 = vunpack.c.l.b16 %v120
    %v201 = vunpack.c.l.b16 %v121
    %v202 = vunpack.c.l.b16 %v122
    %v203 = vunpack.c.l.b16 %v123
    %v204 = vunpack.c.l.b16 %v124
    %v205 = vpack.c.b16 %v190, %v189
    %v206 = vpack.c.b16 %v192, %v191
    %v207 = vpack.c.b16 %v194, %v193
    %v208 = vpack.c.b16 %v196, %v195
    %v209 = vpack.c.b16 %v198, %v197
    %v210 = vpack.c.b16 %v200, %v199
    %v211 = vpack.c.b16 %v202, %v201
    %v212 = vpack.c.b16 %v204, %v203
    %221 = vmatprep.subr.bf16.mxu0 0
    %222 = vmatpush1.bf16.msra.mxu0 %v212
    %223 = vmatprep.subr.bf16.mxu0 0
    %224 = vmatpush1.bf16.msra.mxu0 %v211
    %225 = vmatprep.subr.bf16.mxu0 0
    %226 = vmatpush1.bf16.msra.mxu0 %v210
    %227 = vmatprep.subr.bf16.mxu0 0
    %228 = vmatpush1.bf16.msra.mxu0 %v209
    %229 = vmatprep.subr.bf16.mxu0 0
    %230 = vmatpush1.bf16.msra.mxu0 %v208
    %231 = vmatprep.subr.bf16.mxu0 0
    %232 = vmatpush1.bf16.msra.mxu0 %v207
    %233 = vmatprep.subr.bf16.mxu0 0
    %234 = vmatpush1.bf16.msra.mxu0 %v206
    %235 = vmatprep.subr.bf16.mxu0 0
    %236 = vmatpush1.bf16.msra.mxu0 %v205
    %237 = vmatprep.subr.bf16.mxu0 0
    %238 = vmatpush2.bf16.msra.mxu0 0
    %239 = vmatprep.subr.bf16.mxu0 0
    %240 = vmatpush2.bf16.msra.mxu0 0
    %241 = vmatprep.subr.bf16.mxu0 0
    %242 = vmatpush2.bf16.msra.mxu0 0
    %243 = vmatprep.subr.bf16.mxu0 0
    %244 = vmatpush2.bf16.msra.mxu0 0
    %245 = vmatprep.subr.bf16.mxu0 0
    %246 = vmatpush2.bf16.msra.mxu0 0
    %247 = vmatprep.subr.bf16.mxu0 0
    %248 = vmatpush2.bf16.msra.mxu0 0
    %249 = vmatprep.subr.bf16.mxu0 0
    %250 = vmatpush2.bf16.msra.mxu0 0
    %251 = vmatprep.subr.bf16.mxu0 0
    %252 = vmatpush2.bf16.msra.mxu0 0
    %253 = vmatprep.mubr.bf16.mxu0 0
    %254 = vmatmul.mubr.bf16.gmra.mxu0 %v157
    %v255 = vpop.f32.mrf.mxu0
    %v256 = vadd.f32 0.0, %v255
    %v257 = vpop.f32.mrf.mxu0
    %v258 = vpop.f32.mrf.mxu0
    %v259 = vadd.f32 0.0, %v258
    %v260 = vpop.f32.mrf.mxu0
    %261 = vmatprep.mubr.bf16.mxu0 0
    %262 = vmatmul.mubr.bf16.gmra.mxu0 %v158
    %v263 = vpop.f32.mrf.mxu0
    %v264 = vadd.f32 0.0, %v263
    %v265 = vpop.f32.mrf.mxu0
    %v266 = vpop.f32.mrf.mxu0
    %v267 = vadd.f32 0.0, %v266
    %v268 = vpop.f32.mrf.mxu0
    %269 = vmatprep.mubr.bf16.mxu0 0
    %270 = vmatmul.mubr.bf16.gmra.mxu0 %v159
    %v271 = vpop.f32.mrf.mxu0
    %v272 = vadd.f32 0.0, %v271
    %v273 = vpop.f32.mrf.mxu0
    %v274 = vpop.f32.mrf.mxu0
    %v275 = vadd.f32 0.0, %v274
    %v276 = vpop.f32.mrf.mxu0
    %277 = vmatprep.mubr.bf16.mxu0 0
    %278 = vmatmul.mubr.bf16.gmra.mxu0 %v160
    %v279 = vpop.f32.mrf.mxu0
    %v280 = vadd.f32 0.0, %v279
    %v281 = vpop.f32.mrf.mxu0
    %v282 = vpop.f32.mrf.mxu0
    %v283 = vadd.f32 0.0, %v282
    %v284 = vpop.f32.mrf.mxu0
    %285 = vmatprep.mubr.bf16.mxu0 0
    %286 = vmatmul.mubr.bf16.gmra.mxu0 %v161
    %v287 = vpop.f32.mrf.mxu0
    %v288 = vadd.f32 0.0, %v287
    %v289 = vpop.f32.mrf.mxu0
    %v290 = vpop.f32.mrf.mxu0
    %v291 = vadd.f32 0.0, %v290
    %v292 = vpop.f32.mrf.mxu0
    %293 = vmatprep.mubr.bf16.mxu0 0
    %294 = vmatmul.mubr.bf16.gmra.mxu0 %v162
    %v295 = vpop.f32.mrf.mxu0
    %v296 = vadd.f32 0.0, %v295
    %v297 = vpop.f32.mrf.mxu0
    %v298 = vpop.f32.mrf.mxu0
    %v299 = vadd.f32 0.0, %v298
    %v300 = vpop.f32.mrf.mxu0
    %301 = vmatprep.mubr.bf16.mxu0 0
    %302 = vmatmul.mubr.bf16.gmra.mxu0 %v163
    %v303 = vpop.f32.mrf.mxu0
    %v304 = vadd.f32 0.0, %v303
    %v305 = vpop.f32.mrf.mxu0
    %v306 = vpop.f32.mrf.mxu0
    %v307 = vadd.f32 0.0, %v306
    %v308 = vpop.f32.mrf.mxu0
    %309 = vmatprep.mubr.bf16.mxu0 0
    %310 = vmatmul.mubr.bf16.gmra.mxu0 %v164
    %v311 = vpop.f32.mrf.mxu0
    %v312 = vadd.f32 0.0, %v311
    %v313 = vpop.f32.mrf.mxu0
    %v314 = vpop.f32.mrf.mxu0
    %v315 = vadd.f32 0.0, %v314
    %v316 = vpop.f32.mrf.mxu0
    %317 = vdwg.mxu0
    %v318 = vpack.c.bf16 %v259, %v256
    %v319 = vpack.c.bf16 %v267, %v264
    %v320 = vpack.c.bf16 %v275, %v272
    %v321 = vpack.c.bf16 %v283, %v280
    %v322 = vpack.c.bf16 %v291, %v288
    %v323 = vpack.c.bf16 %v299, %v296
    %v324 = vpack.c.bf16 %v307, %v304
    %v325 = vpack.c.bf16 %v315, %v312
    %v326 = vld [vmem:[#allocation7] sm:$0xf]
    %v327 = vld [vmem:[#allocation7 + $0x4] sm:$0xf]
    %v328 = vld [vmem:[#allocation7 + $0x8] sm:$0xf]
    %v329 = vld [vmem:[#allocation7 + $0xc] sm:$0xf]
    %v330 = vld [vmem:[#allocation7 + $0x10] sm:$0xf]
    %v331 = vld [vmem:[#allocation7 + $0x14] sm:$0xf]
    %v332 = vld [vmem:[#allocation7 + $0x18] sm:$0xf]
    %v333 = vld [vmem:[#allocation7 + $0x1c] sm:$0xf]
    %v334 = vld [vmem:[#allocation7 + $0x20] sm:$0xf]
    %v335 = vld [vmem:[#allocation7 + $0x24] sm:$0xf]
    %v336 = vld [vmem:[#allocation7 + $0x28] sm:$0xf]
    %v337 = vld [vmem:[#allocation7 + $0x2c] sm:$0xf]
    %v338 = vld [vmem:[#allocation7 + $0x30] sm:$0xf]
    %v339 = vld [vmem:[#allocation7 + $0x34] sm:$0xf]
    %v340 = vld [vmem:[#allocation7 + $0x38] sm:$0xf]
    %v341 = vld [vmem:[#allocation7 + $0x3c] sm:$0xf]
    %v358 = vunpack.c.l.b16 %v326
    %v359 = vunpack.c.l.b16 %v327
    %v360 = vunpack.c.l.b16 %v328
    %v361 = vunpack.c.l.b16 %v329
    %v362 = vunpack.c.l.b16 %v330
    %v363 = vunpack.c.l.b16 %v331
    %v364 = vunpack.c.l.b16 %v332
    %v365 = vunpack.c.l.b16 %v333
    %v366 = vunpack.c.l.b16 %v334
    %v367 = vunpack.c.l.b16 %v335
    %v368 = vunpack.c.l.b16 %v336
    %v369 = vunpack.c.l.b16 %v337
    %v370 = vunpack.c.l.b16 %v338
    %v371 = vunpack.c.l.b16 %v339
    %v372 = vunpack.c.l.b16 %v340
    %v373 = vunpack.c.l.b16 %v341
    %v374 = vpack.c.b16 %v359, %v358
    %v375 = vpack.c.b16 %v361, %v360
    %v376 = vpack.c.b16 %v363, %v362
    %v377 = vpack.c.b16 %v365, %v364
    %v378 = vpack.c.b16 %v367, %v366
    %v379 = vpack.c.b16 %v369, %v368
    %v380 = vpack.c.b16 %v371, %v370
    %v381 = vpack.c.b16 %v373, %v372
    %390 = vmatprep.subr.bf16.mxu0 0
    %391 = vmatpush1.bf16.msra.mxu0 %v381
    %392 = vmatprep.subr.bf16.mxu0 0
    %393 = vmatpush1.bf16.msra.mxu0 %v380
    %394 = vmatprep.subr.bf16.mxu0 0
    %395 = vmatpush1.bf16.msra.mxu0 %v379
    %396 = vmatprep.subr.bf16.mxu0 0
    %397 = vmatpush1.bf16.msra.mxu0 %v378
    %398 = vmatprep.subr.bf16.mxu0 0
    %399 = vmatpush1.bf16.msra.mxu0 %v377
    %400 = vmatprep.subr.bf16.mxu0 0
    %401 = vmatpush1.bf16.msra.mxu0 %v376
    %402 = vmatprep.subr.bf16.mxu0 0
    %403 = vmatpush1.bf16.msra.mxu0 %v375
    %404 = vmatprep.subr.bf16.mxu0 0
    %405 = vmatpush1.bf16.msra.mxu0 %v374
    %406 = vmatprep.subr.bf16.mxu0 0
    %407 = vmatpush2.bf16.msra.mxu0 0
    %408 = vmatprep.subr.bf16.mxu0 0
    %409 = vmatpush2.bf16.msra.mxu0 0
    %410 = vmatprep.subr.bf16.mxu0 0
    %411 = vmatpush2.bf16.msra.mxu0 0
    %412 = vmatprep.subr.bf16.mxu0 0
    %413 = vmatpush2.bf16.msra.mxu0 0
    %414 = vmatprep.subr.bf16.mxu0 0
    %415 = vmatpush2.bf16.msra.mxu0 0
    %416 = vmatprep.subr.bf16.mxu0 0
    %417 = vmatpush2.bf16.msra.mxu0 0
    %418 = vmatprep.subr.bf16.mxu0 0
    %419 = vmatpush2.bf16.msra.mxu0 0
    %420 = vmatprep.subr.bf16.mxu0 0
    %421 = vmatpush2.bf16.msra.mxu0 0
    %422 = vmatprep.mubr.bf16.mxu0 0
    %423 = vmatmul.mubr.bf16.gmra.mxu0 %v318
    %v424 = vpop.f32.mrf.mxu0
    %v425 = vadd.f32 0.0, %v424
    %v426 = vpop.f32.mrf.mxu0
    %v427 = vpop.f32.mrf.mxu0
    %v428 = vadd.f32 0.0, %v427
    %v429 = vpop.f32.mrf.mxu0
    %430 = vmatprep.mubr.bf16.mxu0 0
    %431 = vmatmul.mubr.bf16.gmra.mxu0 %v319
    %v432 = vpop.f32.mrf.mxu0
    %v433 = vadd.f32 0.0, %v432
    %v434 = vpop.f32.mrf.mxu0
    %v435 = vpop.f32.mrf.mxu0
    %v436 = vadd.f32 0.0, %v435
    %v437 = vpop.f32.mrf.mxu0
    %438 = vmatprep.mubr.bf16.mxu0 0
    %439 = vmatmul.mubr.bf16.gmra.mxu0 %v320
    %v440 = vpop.f32.mrf.mxu0
    %v441 = vadd.f32 0.0, %v440
    %v442 = vpop.f32.mrf.mxu0
    %v443 = vpop.f32.mrf.mxu0
    %v444 = vadd.f32 0.0, %v443
    %v445 = vpop.f32.mrf.mxu0
    %446 = vmatprep.mubr.bf16.mxu0 0
    %447 = vmatmul.mubr.bf16.gmra.mxu0 %v321
    %v448 = vpop.f32.mrf.mxu0
    %v449 = vadd.f32 0.0, %v448
    %v450 = vpop.f32.mrf.mxu0
    %v451 = vpop.f32.mrf.mxu0
    %v452 = vadd.f32 0.0, %v451
    %v453 = vpop.f32.mrf.mxu0
    %454 = vmatprep.mubr.bf16.mxu0 0
    %455 = vmatmul.mubr.bf16.gmra.mxu0 %v322
    %v456 = vpop.f32.mrf.mxu0
    %v457 = vadd.f32 0.0, %v456
    %v458 = vpop.f32.mrf.mxu0
    %v459 = vpop.f32.mrf.mxu0
    %v460 = vadd.f32 0.0, %v459
    %v461 = vpop.f32.mrf.mxu0
    %462 = vmatprep.mubr.bf16.mxu0 0
    %463 = vmatmul.mubr.bf16.gmra.mxu0 %v323
    %v464 = vpop.f32.mrf.mxu0
    %v465 = vadd.f32 0.0, %v464
    %v466 = vpop.f32.mrf.mxu0
    %v467 = vpop.f32.mrf.mxu0
    %v468 = vadd.f32 0.0, %v467
    %v469 = vpop.f32.mrf.mxu0
    %470 = vmatprep.mubr.bf16.mxu0 0
    %471 = vmatmul.mubr.bf16.gmra.mxu0 %v324
    %v472 = vpop.f32.mrf.mxu0
    %v473 = vadd.f32 0.0, %v472
    %v474 = vpop.f32.mrf.mxu0
    %v475 = vpop.f32.mrf.mxu0
    %v476 = vadd.f32 0.0, %v475
    %v477 = vpop.f32.mrf.mxu0
    %478 = vmatprep.mubr.bf16.mxu0 0
    %479 = vmatmul.mubr.bf16.gmra.mxu0 %v325
    %v480 = vpop.f32.mrf.mxu0
    %v481 = vadd.f32 0.0, %v480
    %v482 = vpop.f32.mrf.mxu0
    %v483 = vpop.f32.mrf.mxu0
    %v484 = vadd.f32 0.0, %v483
    %v485 = vpop.f32.mrf.mxu0
    %486 = vdwg.mxu0
    %v487 = vmax.f32 %v425, 0.0
    %v488 = vmax.f32 %v428, 0.0
    %v489 = vmax.f32 %v433, 0.0
    %v490 = vmax.f32 %v436, 0.0
    %v491 = vmax.f32 %v441, 0.0
    %v492 = vmax.f32 %v444, 0.0
    %v493 = vmax.f32 %v449, 0.0
    %v494 = vmax.f32 %v452, 0.0
    %v495 = vmax.f32 %v457, 0.0
    %v496 = vmax.f32 %v460, 0.0
    %v497 = vmax.f32 %v465, 0.0
    %v498 = vmax.f32 %v468, 0.0
    %v499 = vmax.f32 %v473, 0.0
    %v500 = vmax.f32 %v476, 0.0
    %v501 = vmax.f32 %v481, 0.0
    %v502 = vmax.f32 %v484, 0.0
    %v503 = vpack.c.bf16 %v488, %v487
    %v504 = vpack.c.bf16 %v490, %v489
    %v505 = vpack.c.bf16 %v492, %v491
    %v506 = vpack.c.bf16 %v494, %v493
    %v507 = vpack.c.bf16 %v496, %v495
    %v508 = vpack.c.bf16 %v498, %v497
    %v509 = vpack.c.bf16 %v500, %v499
    %v510 = vpack.c.bf16 %v502, %v501
    %511 = vmatprep.subr.bf16.mxu0 0
    %512 = vmatpush1.bf16.msra.mxu0 %v510
    %513 = vmatprep.subr.bf16.mxu0 0
    %514 = vmatpush1.bf16.msra.mxu0 %v509
    %515 = vmatprep.subr.bf16.mxu0 0
    %516 = vmatpush1.bf16.msra.mxu0 %v508
    %517 = vmatprep.subr.bf16.mxu0 0
    %518 = vmatpush1.bf16.msra.mxu0 %v507
    %519 = vmatprep.subr.bf16.mxu0 0
    %520 = vmatpush1.bf16.msra.mxu0 %v506
    %521 = vmatprep.subr.bf16.mxu0 0
    %522 = vmatpush1.bf16.msra.mxu0 %v505
    %523 = vmatprep.subr.bf16.mxu0 0
    %524 = vmatpush1.bf16.msra.mxu0 %v504
    %525 = vmatprep.subr.bf16.mxu0 0
    %526 = vmatpush1.bf16.msra.mxu0 %v503
    %527 = vmatprep.subr.bf16.mxu0 0
    %528 = vmatpush2.bf16.msra.mxu0 0
    %529 = vmatprep.subr.bf16.mxu0 0
    %530 = vmatpush2.bf16.msra.mxu0 0
    %531 = vmatprep.subr.bf16.mxu0 0
    %532 = vmatpush2.bf16.msra.mxu0 0
    %533 = vmatprep.subr.bf16.mxu0 0
    %534 = vmatpush2.bf16.msra.mxu0 0
    %535 = vmatprep.subr.bf16.mxu0 0
    %536 = vmatpush2.bf16.msra.mxu0 0
    %537 = vmatprep.subr.bf16.mxu0 0
    %538 = vmatpush2.bf16.msra.mxu0 0
    %539 = vmatprep.subr.bf16.mxu0 0
    %540 = vmatpush2.bf16.msra.mxu0 0
    %541 = vmatprep.subr.bf16.mxu0 0
    %542 = vmatpush2.bf16.msra.mxu0 0
    %543 = vmatprep.mubr.bf16.mxu0 0
    %544 = vmatmul.mubr.bf16.gmra.mxu0 %v157
    %v545 = vpop.f32.mrf.mxu0
    %v546 = vadd.f32 0.0, %v545
    %v547 = vpop.f32.mrf.mxu0
    %v548 = vpop.f32.mrf.mxu0
    %v549 = vadd.f32 0.0, %v548
    %v550 = vpop.f32.mrf.mxu0
    %551 = vmatprep.mubr.bf16.mxu0 0
    %552 = vmatmul.mubr.bf16.gmra.mxu0 %v158
    %v553 = vpop.f32.mrf.mxu0
    %v554 = vadd.f32 0.0, %v553
    %v555 = vpop.f32.mrf.mxu0
    %v556 = vpop.f32.mrf.mxu0
    %v557 = vadd.f32 0.0, %v556
    %v558 = vpop.f32.mrf.mxu0
    %559 = vmatprep.mubr.bf16.mxu0 0
    %560 = vmatmul.mubr.bf16.gmra.mxu0 %v159
    %v561 = vpop.f32.mrf.mxu0
    %v562 = vadd.f32 0.0, %v561
    %v563 = vpop.f32.mrf.mxu0
    %v564 = vpop.f32.mrf.mxu0
    %v565 = vadd.f32 0.0, %v564
    %v566 = vpop.f32.mrf.mxu0
    %567 = vmatprep.mubr.bf16.mxu0 0
    %568 = vmatmul.mubr.bf16.gmra.mxu0 %v160
    %v569 = vpop.f32.mrf.mxu0
    %v570 = vadd.f32 0.0, %v569
    %v571 = vpop.f32.mrf.mxu0
    %v572 = vpop.f32.mrf.mxu0
    %v573 = vadd.f32 0.0, %v572
    %v574 = vpop.f32.mrf.mxu0
    %575 = vmatprep.mubr.bf16.mxu0 0
    %576 = vmatmul.mubr.bf16.gmra.mxu0 %v161
    %v577 = vpop.f32.mrf.mxu0
    %v578 = vadd.f32 0.0, %v577
    %v579 = vpop.f32.mrf.mxu0
    %v580 = vpop.f32.mrf.mxu0
    %v581 = vadd.f32 0.0, %v580
    %v582 = vpop.f32.mrf.mxu0
    %583 = vmatprep.mubr.bf16.mxu0 0
    %584 = vmatmul.mubr.bf16.gmra.mxu0 %v162
    %v585 = vpop.f32.mrf.mxu0
    %v586 = vadd.f32 0.0, %v585
    %v587 = vpop.f32.mrf.mxu0
    %v588 = vpop.f32.mrf.mxu0
    %v589 = vadd.f32 0.0, %v588
    %v590 = vpop.f32.mrf.mxu0
    %591 = vmatprep.mubr.bf16.mxu0 0
    %592 = vmatmul.mubr.bf16.gmra.mxu0 %v163
    %v593 = vpop.f32.mrf.mxu0
    %v594 = vadd.f32 0.0, %v593
    %v595 = vpop.f32.mrf.mxu0
    %v596 = vpop.f32.mrf.mxu0
    %v597 = vadd.f32 0.0, %v596
    %v598 = vpop.f32.mrf.mxu0
    %599 = vmatprep.mubr.bf16.mxu0 0
    %600 = vmatmul.mubr.bf16.gmra.mxu0 %v164
    %v601 = vpop.f32.mrf.mxu0
    %v602 = vadd.f32 0.0, %v601
    %v603 = vpop.f32.mrf.mxu0
    %v604 = vpop.f32.mrf.mxu0
    %v605 = vadd.f32 0.0, %v604
    %v606 = vpop.f32.mrf.mxu0
    %607 = vdwg.mxu0
    %v608 = vpack.c.bf16 %v549, %v546
    %v609 = vpack.c.bf16 %v557, %v554
    %v610 = vpack.c.bf16 %v565, %v562
    %v611 = vpack.c.bf16 %v573, %v570
    %v612 = vpack.c.bf16 %v581, %v578
    %v613 = vpack.c.bf16 %v589, %v586
    %v614 = vpack.c.bf16 %v597, %v594
    %v615 = vpack.c.bf16 %v605, %v602
    %v616 = vld [vmem:[#allocation8] sm:$0xf]
    %v617 = vld [vmem:[#allocation8 + $0x4] sm:$0xf]
    %v618 = vld [vmem:[#allocation8 + $0x8] sm:$0xf]
    %v619 = vld [vmem:[#allocation8 + $0xc] sm:$0xf]
    %v620 = vld [vmem:[#allocation8 + $0x10] sm:$0xf]
    %v621 = vld [vmem:[#allocation8 + $0x14] sm:$0xf]
    %v622 = vld [vmem:[#allocation8 + $0x18] sm:$0xf]
    %v623 = vld [vmem:[#allocation8 + $0x1c] sm:$0xf]
    %v624 = vld [vmem:[#allocation8 + $0x20] sm:$0xf]
    %v625 = vld [vmem:[#allocation8 + $0x24] sm:$0xf]
    %v626 = vld [vmem:[#allocation8 + $0x28] sm:$0xf]
    %v627 = vld [vmem:[#allocation8 + $0x2c] sm:$0xf]
    %v628 = vld [vmem:[#allocation8 + $0x30] sm:$0xf]
    %v629 = vld [vmem:[#allocation8 + $0x34] sm:$0xf]
    %v630 = vld [vmem:[#allocation8 + $0x38] sm:$0xf]
    %v631 = vld [vmem:[#allocation8 + $0x3c] sm:$0xf]
    %v648 = vunpack.c.l.b16 %v616
    %v649 = vunpack.c.l.b16 %v617
    %v650 = vunpack.c.l.b16 %v618
    %v651 = vunpack.c.l.b16 %v619
    %v652 = vunpack.c.l.b16 %v620
    %v653 = vunpack.c.l.b16 %v621
    %v654 = vunpack.c.l.b16 %v622
    %v655 = vunpack.c.l.b16 %v623
    %v656 = vunpack.c.l.b16 %v624
    %v657 = vunpack.c.l.b16 %v625
    %v658 = vunpack.c.l.b16 %v626
    %v659 = vunpack.c.l.b16 %v627
    %v660 = vunpack.c.l.b16 %v628
    %v661 = vunpack.c.l.b16 %v629
    %v662 = vunpack.c.l.b16 %v630
    %v663 = vunpack.c.l.b16 %v631
    %v664 = vpack.c.b16 %v649, %v648
    %v665 = vpack.c.b16 %v651, %v650
    %v666 = vpack.c.b16 %v653, %v652
    %v667 = vpack.c.b16 %v655, %v654
    %v668 = vpack.c.b16 %v657, %v656
    %v669 = vpack.c.b16 %v659, %v658
    %v670 = vpack.c.b16 %v661, %v660
    %v671 = vpack.c.b16 %v663, %v662
    %680 = vmatprep.subr.bf16.mxu0 0
    %681 = vmatpush1.bf16.msra.mxu0 %v671
    %682 = vmatprep.subr.bf16.mxu0 0
    %683 = vmatpush1.bf16.msra.mxu0 %v670
    %684 = vmatprep.subr.bf16.mxu0 0
    %685 = vmatpush1.bf16.msra.mxu0 %v669
    %686 = vmatprep.subr.bf16.mxu0 0
    %687 = vmatpush1.bf16.msra.mxu0 %v668
    %688 = vmatprep.subr.bf16.mxu0 0
    %689 = vmatpush1.bf16.msra.mxu0 %v667
    %690 = vmatprep.subr.bf16.mxu0 0
    %691 = vmatpush1.bf16.msra.mxu0 %v666
    %692 = vmatprep.subr.bf16.mxu0 0
    %693 = vmatpush1.bf16.msra.mxu0 %v665
    %694 = vmatprep.subr.bf16.mxu0 0
    %695 = vmatpush1.bf16.msra.mxu0 %v664
    %696 = vmatprep.subr.bf16.mxu0 0
    %697 = vmatpush2.bf16.msra.mxu0 0
    %698 = vmatprep.subr.bf16.mxu0 0
    %699 = vmatpush2.bf16.msra.mxu0 0
    %700 = vmatprep.subr.bf16.mxu0 0
    %701 = vmatpush2.bf16.msra.mxu0 0
    %702 = vmatprep.subr.bf16.mxu0 0
    %703 = vmatpush2.bf16.msra.mxu0 0
    %704 = vmatprep.subr.bf16.mxu0 0
    %705 = vmatpush2.bf16.msra.mxu0 0
    %706 = vmatprep.subr.bf16.mxu0 0
    %707 = vmatpush2.bf16.msra.mxu0 0
    %708 = vmatprep.subr.bf16.mxu0 0
    %709 = vmatpush2.bf16.msra.mxu0 0
    %710 = vmatprep.subr.bf16.mxu0 0
    %711 = vmatpush2.bf16.msra.mxu0 0
    %712 = vmatprep.mubr.bf16.mxu0 0
    %713 = vmatmul.mubr.bf16.gmra.mxu0 %v608
    %v714 = vpop.f32.mrf.mxu0
    %v715 = vadd.f32 0.0, %v714
    %v716 = vpop.f32.mrf.mxu0
    %v717 = vpop.f32.mrf.mxu0
    %v718 = vadd.f32 0.0, %v717
    %v719 = vpop.f32.mrf.mxu0
    %720 = vmatprep.mubr.bf16.mxu0 0
    %721 = vmatmul.mubr.bf16.gmra.mxu0 %v609
    %v722 = vpop.f32.mrf.mxu0
    %v723 = vadd.f32 0.0, %v722
    %v724 = vpop.f32.mrf.mxu0
    %v725 = vpop.f32.mrf.mxu0
    %v726 = vadd.f32 0.0, %v725
    %v727 = vpop.f32.mrf.mxu0
    %728 = vmatprep.mubr.bf16.mxu0 0
    %729 = vmatmul.mubr.bf16.gmra.mxu0 %v610
    %v730 = vpop.f32.mrf.mxu0
    %v731 = vadd.f32 0.0, %v730
    %v732 = vpop.f32.mrf.mxu0
    %v733 = vpop.f32.mrf.mxu0
    %v734 = vadd.f32 0.0, %v733
    %v735 = vpop.f32.mrf.mxu0
    %736 = vmatprep.mubr.bf16.mxu0 0
    %737 = vmatmul.mubr.bf16.gmra.mxu0 %v611
    %v738 = vpop.f32.mrf.mxu0
    %v739 = vadd.f32 0.0, %v738
    %v740 = vpop.f32.mrf.mxu0
    %v741 = vpop.f32.mrf.mxu0
    %v742 = vadd.f32 0.0, %v741
    %v743 = vpop.f32.mrf.mxu0
    %744 = vmatprep.mubr.bf16.mxu0 0
    %745 = vmatmul.mubr.bf16.gmra.mxu0 %v612
    %v746 = vpop.f32.mrf.mxu0
    %v747 = vadd.f32 0.0, %v746
    %v748 = vpop.f32.mrf.mxu0
    %v749 = vpop.f32.mrf.mxu0
    %v750 = vadd.f32 0.0, %v749
    %v751 = vpop.f32.mrf.mxu0
    %752 = vmatprep.mubr.bf16.mxu0 0
    %753 = vmatmul.mubr.bf16.gmra.mxu0 %v613
    %v754 = vpop.f32.mrf.mxu0
    %v755 = vadd.f32 0.0, %v754
    %v756 = vpop.f32.mrf.mxu0
    %v757 = vpop.f32.mrf.mxu0
    %v758 = vadd.f32 0.0, %v757
    %v759 = vpop.f32.mrf.mxu0
    %760 = vmatprep.mubr.bf16.mxu0 0
    %761 = vmatmul.mubr.bf16.gmra.mxu0 %v614
    %v762 = vpop.f32.mrf.mxu0
    %v763 = vadd.f32 0.0, %v762
    %v764 = vpop.f32.mrf.mxu0
    %v765 = vpop.f32.mrf.mxu0
    %v766 = vadd.f32 0.0, %v765
    %v767 = vpop.f32.mrf.mxu0
    %768 = vmatprep.mubr.bf16.mxu0 0
    %769 = vmatmul.mubr.bf16.gmra.mxu0 %v615
    %v770 = vpop.f32.mrf.mxu0
    %v771 = vadd.f32 0.0, %v770
    %v772 = vpop.f32.mrf.mxu0
    %v773 = vpop.f32.mrf.mxu0
    %v774 = vadd.f32 0.0, %v773
    %v775 = vpop.f32.mrf.mxu0
    %776 = vdwg.mxu0
    %v777 = vmax.f32 %v715, 0.0
    %v778 = vmax.f32 %v718, 0.0
    %v779 = vmax.f32 %v723, 0.0
    %v780 = vmax.f32 %v726, 0.0
    %v781 = vmax.f32 %v731, 0.0
    %v782 = vmax.f32 %v734, 0.0
    %v783 = vmax.f32 %v739, 0.0
    %v784 = vmax.f32 %v742, 0.0
    %v785 = vmax.f32 %v747, 0.0
    %v786 = vmax.f32 %v750, 0.0
    %v787 = vmax.f32 %v755, 0.0
    %v788 = vmax.f32 %v758, 0.0
    %v789 = vmax.f32 %v763, 0.0
    %v790 = vmax.f32 %v766, 0.0
    %v791 = vmax.f32 %v771, 0.0
    %v792 = vmax.f32 %v774, 0.0
    %v793 = vpack.c.bf16 %v778, %v777
    %v794 = vpack.c.bf16 %v780, %v779
    %v795 = vpack.c.bf16 %v782, %v781
    %v796 = vpack.c.bf16 %v784, %v783
    %v797 = vpack.c.bf16 %v786, %v785
    %v798 = vpack.c.bf16 %v788, %v787
    %v799 = vpack.c.bf16 %v790, %v789
    %v800 = vpack.c.bf16 %v792, %v791
    %v801 = vld [vmem:[#allocation10] sm:$0xf]
    %v802 = vld [vmem:[#allocation10 + $0x4] sm:$0xf]
    %v803 = vld [vmem:[#allocation10 + $0x8] sm:$0xf]
    %v804 = vld [vmem:[#allocation10 + $0xc] sm:$0xf]
    %v805 = vld [vmem:[#allocation10 + $0x10] sm:$0xf]
    %v806 = vld [vmem:[#allocation10 + $0x14] sm:$0xf]
    %v807 = vld [vmem:[#allocation10 + $0x18] sm:$0xf]
    %v808 = vld [vmem:[#allocation10 + $0x1c] sm:$0xf]
    %v809 = vld [vmem:[#allocation10 + $0x20] sm:$0xf]
    %v810 = vld [vmem:[#allocation10 + $0x24] sm:$0xf]
    %v811 = vld [vmem:[#allocation10 + $0x28] sm:$0xf]
    %v812 = vld [vmem:[#allocation10 + $0x2c] sm:$0xf]
    %v813 = vld [vmem:[#allocation10 + $0x30] sm:$0xf]
    %v814 = vld [vmem:[#allocation10 + $0x34] sm:$0xf]
    %v815 = vld [vmem:[#allocation10 + $0x38] sm:$0xf]
    %v816 = vld [vmem:[#allocation10 + $0x3c] sm:$0xf]
    %v817 = vld [vmem:[%s5] sm:$0x1]
    %v819 = vlaneseq
    %v820 = vshrl.u32 %v819, 7
    %v821 = vsub.s32 0, %v820
    %v822 = vrot.slane %v817, %v821
    %v840 = vunpack.c.l.b16 %v801
    %v841 = vunpack.c.l.b16 %v802
    %v842 = vunpack.c.l.b16 %v803
    %v843 = vunpack.c.l.b16 %v804
    %v844 = vunpack.c.l.b16 %v805
    %v845 = vunpack.c.l.b16 %v806
    %v846 = vunpack.c.l.b16 %v807
    %v847 = vunpack.c.l.b16 %v808
    %v848 = vunpack.c.l.b16 %v809
    %v849 = vunpack.c.l.b16 %v810
    %v850 = vunpack.c.l.b16 %v811
    %v851 = vunpack.c.l.b16 %v812
    %v852 = vunpack.c.l.b16 %v813
    %v853 = vunpack.c.l.b16 %v814
    %v854 = vunpack.c.l.b16 %v815
    %v855 = vunpack.c.l.b16 %v816
    %v856 = vpack.c.b16 %v841, %v840
    %v857 = vpack.c.b16 %v843, %v842
    %v858 = vpack.c.b16 %v845, %v844
    %v859 = vpack.c.b16 %v847, %v846
    %v860 = vpack.c.b16 %v849, %v848
    %v861 = vpack.c.b16 %v851, %v850
    %v862 = vpack.c.b16 %v853, %v852
    %v863 = vpack.c.b16 %v855, %v854
    %872 = vmatprep.subr.bf16.mxu0 0
    %873 = vmatpush1.bf16.msra.mxu0 %v863
    %874 = vmatprep.subr.bf16.mxu0 0
    %875 = vmatpush1.bf16.msra.mxu0 %v862
    %876 = vmatprep.subr.bf16.mxu0 0
    %877 = vmatpush1.bf16.msra.mxu0 %v861
    %878 = vmatprep.subr.bf16.mxu0 0
    %879 = vmatpush1.bf16.msra.mxu0 %v860
    %880 = vmatprep.subr.bf16.mxu0 0
    %881 = vmatpush1.bf16.msra.mxu0 %v859
    %882 = vmatprep.subr.bf16.mxu0 0
    %883 = vmatpush1.bf16.msra.mxu0 %v858
    %884 = vmatprep.subr.bf16.mxu0 0
    %885 = vmatpush1.bf16.msra.mxu0 %v857
    %886 = vmatprep.subr.bf16.mxu0 0
    %887 = vmatpush1.bf16.msra.mxu0 %v856
    %888 = vmatprep.subr.bf16.mxu0 0
    %889 = vmatpush2.bf16.msra.mxu0 0
    %890 = vmatprep.subr.bf16.mxu0 0
    %891 = vmatpush2.bf16.msra.mxu0 0
    %892 = vmatprep.subr.bf16.mxu0 0
    %893 = vmatpush2.bf16.msra.mxu0 0
    %894 = vmatprep.subr.bf16.mxu0 0
    %895 = vmatpush2.bf16.msra.mxu0 0
    %896 = vmatprep.subr.bf16.mxu0 0
    %897 = vmatpush2.bf16.msra.mxu0 0
    %898 = vmatprep.subr.bf16.mxu0 0
    %899 = vmatpush2.bf16.msra.mxu0 0
    %900 = vmatprep.subr.bf16.mxu0 0
    %901 = vmatpush2.bf16.msra.mxu0 0
    %902 = vmatprep.subr.bf16.mxu0 0
    %903 = vmatpush2.bf16.msra.mxu0 0
    %904 = vmatprep.mubr.bf16.mxu0 0
    %905 = vmatmul.mubr.bf16.gmra.mxu0 %v793
    %v906 = vpop.f32.mrf.mxu0
    %v907 = vadd.f32 %v822, %v906
    %v908 = vpop.f32.mrf.mxu0
    %v909 = vpop.f32.mrf.mxu0
    %v910 = vadd.f32 %v822, %v909
    %v911 = vpop.f32.mrf.mxu0
    %912 = vmatprep.mubr.bf16.mxu0 0
    %913 = vmatmul.mubr.bf16.gmra.mxu0 %v794
    %v914 = vpop.f32.mrf.mxu0
    %v915 = vadd.f32 %v822, %v914
    %v916 = vpop.f32.mrf.mxu0
    %v917 = vpop.f32.mrf.mxu0
    %v918 = vadd.f32 %v822, %v917
    %v919 = vpop.f32.mrf.mxu0
    %920 = vmatprep.mubr.bf16.mxu0 0
    %921 = vmatmul.mubr.bf16.gmra.mxu0 %v795
    %v922 = vpop.f32.mrf.mxu0
    %v923 = vadd.f32 %v822, %v922
    %v924 = vpop.f32.mrf.mxu0
    %v925 = vpop.f32.mrf.mxu0
    %v926 = vadd.f32 %v822, %v925
    %v927 = vpop.f32.mrf.mxu0
    %928 = vmatprep.mubr.bf16.mxu0 0
    %929 = vmatmul.mubr.bf16.gmra.mxu0 %v796
    %v930 = vpop.f32.mrf.mxu0
    %v931 = vadd.f32 %v822, %v930
    %v932 = vpop.f32.mrf.mxu0
    %v933 = vpop.f32.mrf.mxu0
    %v934 = vadd.f32 %v822, %v933
    %v935 = vpop.f32.mrf.mxu0
    %936 = vmatprep.mubr.bf16.mxu0 0
    %937 = vmatmul.mubr.bf16.gmra.mxu0 %v797
    %v938 = vpop.f32.mrf.mxu0
    %v939 = vadd.f32 %v822, %v938
    %v940 = vpop.f32.mrf.mxu0
    %v941 = vpop.f32.mrf.mxu0
    %v942 = vadd.f32 %v822, %v941
    %v943 = vpop.f32.mrf.mxu0
    %944 = vmatprep.mubr.bf16.mxu0 0
    %945 = vmatmul.mubr.bf16.gmra.mxu0 %v798
    %v946 = vpop.f32.mrf.mxu0
    %v947 = vadd.f32 %v822, %v946
    %v948 = vpop.f32.mrf.mxu0
    %v949 = vpop.f32.mrf.mxu0
    %v950 = vadd.f32 %v822, %v949
    %v951 = vpop.f32.mrf.mxu0
    %952 = vmatprep.mubr.bf16.mxu0 0
    %953 = vmatmul.mubr.bf16.gmra.mxu0 %v799
    %v954 = vpop.f32.mrf.mxu0
    %v955 = vadd.f32 %v822, %v954
    %v956 = vpop.f32.mrf.mxu0
    %v957 = vpop.f32.mrf.mxu0
    %v958 = vadd.f32 %v822, %v957
    %v959 = vpop.f32.mrf.mxu0
    %960 = vmatprep.mubr.bf16.mxu0 0
    %961 = vmatmul.mubr.bf16.gmra.mxu0 %v800
    %v962 = vpop.f32.mrf.mxu0
    %v963 = vadd.f32 %v822, %v962
    %v964 = vpop.f32.mrf.mxu0
    %v965 = vpop.f32.mrf.mxu0
    %v966 = vadd.f32 %v822, %v965
    %v967 = vpop.f32.mrf.mxu0
    %968 = vdwg.mxu0
    %969 = vst [vmem:[#allocation11] sm:$0xff] %v907
    %970 = vst [vmem:[#allocation11 + $0x8] sm:$0xff] %v910
    %971 = vst [vmem:[#allocation11 + $0x10] sm:$0xff] %v915
    %972 = vst [vmem:[#allocation11 + $0x18] sm:$0xff] %v918
    %973 = vst [vmem:[#allocation11 + $0x20] sm:$0xff] %v923
    %974 = vst [vmem:[#allocation11 + $0x28] sm:$0xff] %v926
    %975 = vst [vmem:[#allocation11 + $0x30] sm:$0xff] %v931
    %976 = vst [vmem:[#allocation11 + $0x38] sm:$0xff] %v934
    %977 = vst [vmem:[#allocation11 + $0x40] sm:$0xff] %v939
    %978 = vst [vmem:[#allocation11 + $0x48] sm:$0xff] %v942
    %979 = vst [vmem:[#allocation11 + $0x50] sm:$0xff] %v947
    %980 = vst [vmem:[#allocation11 + $0x58] sm:$0xff] %v950
    %981 = vst [vmem:[#allocation11 + $0x60] sm:$0xff] %v955
    %982 = vst [vmem:[#allocation11 + $0x68] sm:$0xff] %v958
    %983 = vst [vmem:[#allocation11 + $0x70] sm:$0xff] %v963
    %984 = vst [vmem:[#allocation11 + $0x78] sm:$0xff] %v966
    // Predicated region
    $region46: #{tpu_custom_call.1} parent=1 // pred_check
      _
    $region47: #{tpu_custom_call.1} parent=1 // pred_check_branch
      %986 = sbr.rel (0) target = $region49
    $region48: #{tpu_custom_call.1} parent=1 // pred_region
      %s988 = ssub.s32 2048, 2048
      %989 = vsyncadd [#allocation4], %s988
      %s990 = sshll.u32 [#allocation11], 4
      %s991 = int_to_ptr.vmem [resolvable:$true] %s990
      %996 = dma.vmem_to_hbm [thread:$0]  %s991, 2048, %s6, [#allocation4], 128, 128, 8
    $region49: #{tpu_custom_call.1} parent=1 // pred_fallthru
      _
    // Predicated region
    $region50: #{tpu_custom_call.1} parent=1 // pred_check
      _
    $region51: #{tpu_custom_call.1} parent=1 // pred_check_branch
      %998 = sbr.rel (0) target = $region53
    $region52: #{tpu_custom_call.1} parent=1 // pred_region
      %999 = dma.done [#allocation4], 2048
    $region53: #{tpu_custom_call.1} parent=1 // pred_fallthru
      _
    %1000 = vsyncpa [#allocation3], 1
    %1001 = vsyncpa [#allocation6], 1
    %1002 = vsyncpa [#allocation9], 1
    %1003 = vsyncpa [#allocation4], 1

</llo_original>
